<compile_context>
chip_gen: v7x
topology: tpu7x:2x2x1
jax: 0.10.0
libtpu: 0.0.40
codegen_flags: <defaults>
</compile_context>

<pallas_src>
import jax
import jax.numpy as jnp
from jax import lax
from jax.experimental import pallas as pl
from jax.experimental.pallas import tpu as pltpu


def _round_up(x, m):
    return (x + m - 1) // m * m


def _ceil_div(a, b):
    return (a + b - 1) // b


# ----------------------------------------------------------------------------
# Kernel factory: fused Linear(D -> 1) + Sigmoid, lane-dense accumulator
# ----------------------------------------------------------------------------
def _make_kernel(tk, d_total, needs_mask):
    n_chunks = tk // 128

    def kernel(x_ref, w_ref, b_ref, o_ref, acc_ref):
        k = pl.program_id(1)

        @pl.when(k == 0)
        def _():
            acc_ref[...] = jnp.zeros_like(acc_ref)

        # Accumulate x * w into a lane-dense (tm, 128) f32 accumulator using
        # plain full-width VPU ops (no per-step cross-lane reduce, no masked
        # 1-lane stores).  Static unrolled loop over 128-wide lane chunks.
        acc = acc_ref[...]
        for j in range(n_chunks):
            start = pl.multiple_of(k * tk + j * 128, 128)
            xj = x_ref[:, j * 128:(j + 1) * 128].astype(jnp.float32)  # (tm,128)
            wj = w_ref[:, pl.ds(start, 128)]                          # (1, 128)
            pj = xj * wj
            if needs_mask:
                # Ragged feature tail: zero contributions from columns >= D
                # (x block may contain stale/garbage VMEM beyond the array).
                col = start + lax.broadcasted_iota(jnp.int32, (1, 128), 1)
                pj = jnp.where(col < d_total, pj, 0.0)
            acc = acc + pj
        acc_ref[...] = acc

        # Epilogue on the last feature step: 128->1 reduce, bias, sigmoid.
        @pl.when(k == pl.num_programs(1) - 1)
        def _():
            z = jnp.sum(acc_ref[...], axis=-1, keepdims=True) + b_ref[0]
            o_ref[...] = (1.0 / (1.0 + jnp.exp(-z))).astype(o_ref.dtype)

    return kernel


# ----------------------------------------------------------------------------
# Wrapper
# ----------------------------------------------------------------------------
def domain_classifier_forward(x, w, b):
    """y = sigmoid(x @ w.T + b).

    x: (B, D) activations, any float dtype (streamed natively, upcast in-kernel)
    w: (1, D)  (PyTorch nn.Linear weight layout)
    b: (1,)
    returns (B, 1) float32
    """
    B, D = x.shape
    assert w.shape == (1, D)
    assert b.shape == (1,)

    itemsize = jnp.dtype(x.dtype).itemsize

    # ---- tile selection ----------------------------------------------------
    # Batch tile: multiple of 16 (bf16 sublane packing), capped at 512.
    tm = min(512, _round_up(B, 16))
    # Make sure a modest batch still yields >= 2 batch tiles so both v7x
    # TensorCores (parallel grid axis) get work.
    if tm >= 32 and _ceil_div(B, tm) < 2:
        tm = max(16, _round_up(_ceil_div(B, 2), 16))
    # Feature tile: multiple of 128, sized for ~4 MiB of x per tile
    # (~8 MiB double-buffered): fits v5e 16 MiB default scoped VMEM, well
    # under v6e/v7x 32 MiB.  (On v7x one could add pipeline_mode=pl.Buffered(3)
    # on the x spec; kept at the default 2 for a generation-safe VMEM budget.)
    target_bytes = 4 * 1024 * 1024
    tk_cap = (target_bytes // (tm * itemsize)) // 128 * 128
    tk = max(128, min(_round_up(D, 128), tk_cap))

    it = _ceil_div(B, tm)   # batch tiles
    kt = _ceil_div(D, tk)   # feature (reduction) tiles

    # Weight: tiny — cast/zero-pad in the wrapper, keep fully VMEM-resident.
    dw = kt * tk
    wf = w.astype(jnp.float32)
    if dw != D:
        wf = jnp.pad(wf, ((0, 0), (0, dw - D)))
    bf = b.astype(jnp.float32).reshape(1)

    kernel = _make_kernel(tk, D, needs_mask=(D % tk != 0))

    out = pl.pallas_call(
        kernel,
        out_shape=jax.ShapeDtypeStruct((B, 1), jnp.float32),
        grid_spec=pltpu.PrefetchScalarGridSpec(
            num_scalar_prefetch=0,
            grid=(it, kt),
            in_specs=[
                # x streamed in native dtype, large tiles.
                pl.BlockSpec((tm, tk), lambda i, k: (i, k)),
                # Weight fully resident (constant block index -> DMA'd once).
                pl.BlockSpec((1, dw), lambda i, k: (0, 0)),
                # Bias scalar via the SMEM scalar path.
                pl.BlockSpec(memory_space=pltpu.MemorySpace.SMEM),
            ],
            out_specs=pl.BlockSpec((tm, 1), lambda i, k: (i, 0)),
            scratch_shapes=[pltpu.VMEM((tm, 128), jnp.float32)],
        ),
        compiler_params=pltpu.CompilerParams(
            dimension_semantics=("parallel", "arbitrary")),
        cost_estimate=pl.CostEstimate(
            flops=2 * B * D,
            transcendentals=B,
            bytes_accessed=B * D * itemsize + dw * 4 + B * 4),
    )(x, wf, bf)
    return out


# ----------------------------------------------------------------------------
# Deterministic parameter construction (PyTorch nn.Linear-style init)
# ----------------------------------------------------------------------------
def init_params(feature_dim, seed=0):
    key = jax.random.PRNGKey(seed)
    kw, kb = jax.random.split(key)
    bound = 1.0 / (feature_dim ** 0.5)
    w = jax.random.uniform(kw, (1, feature_dim), jnp.float32, -bound, bound)
    b = jax.random.uniform(kb, (1,), jnp.float32, -bound, bound)
    return {"w": w, "b": b}


if __name__ == "__main__":
    FEATURE_DIM = 512
    BATCH = 2

    key = jax.random.PRNGKey(0)
    kx, _ = jax.random.split(key)
    x = jax.random.normal(kx, (BATCH, FEATURE_DIM), jnp.float32)
    params = init_params(FEATURE_DIM, seed=0)

    out = jax.block_until_ready(
        domain_classifier_forward(x, params["w"], params["b"]))

    # Pure-JAX reference check.
    ref = jax.nn.sigmoid(x @ params["w"].T + params["b"])
    assert out.shape == (BATCH, 1)
    assert bool(jnp.all(jnp.isfinite(out)))
    assert bool(jnp.allclose(out, ref, atol=1e-5, rtol=1e-5))
    print("KERNEL_OK")
</pallas_src>

<mosaic_0001>
module attributes {stable_mosaic.version = 11 : i64} {
  func.func @kernel(%arg0: i32, %arg1: i32, %arg2: memref<16x512xf32, #tpu.memory_space<vmem>>, %arg3: memref<1x512xf32, #tpu.memory_space<vmem>>, %arg4: memref<1xf32, #tpu.memory_space<smem>>, %arg5: memref<16x1xf32, #tpu.memory_space<vmem>>, %arg6: memref<16x128xf32, #tpu.memory_space<vmem>>) attributes {dimension_semantics = [#tpu.dimension_semantics<parallel>, #tpu.dimension_semantics<arbitrary>], iteration_bounds = array<i64: 1, 1>, scalar_prefetch = 0 : i64, scratch_operands = 1 : i64, tpu.core_type = #tpu.core_type<tc>, window_params = [{transform_indices = @transform_0, window_bounds = array<i64: 16, 512>}, {pipeline_mode = #tpu.pipeline_mode<synchronous>, transform_indices = @transform_1, window_bounds = array<i64: 1, 512>}, {transform_indices = @transform_2, window_bounds = array<i64: 1>}, {transform_indices = @transform_3, window_bounds = array<i64: 16, 1>}]} {
    %c0_i32 = arith.constant 0 : i32
    %0 = arith.cmpi eq, %arg1, %c0_i32 : i32
    %1 = arith.extui %0 : i1 to i32
    %c0_i32_0 = arith.constant 0 : i32
    %2 = arith.cmpi ne, %1, %c0_i32_0 : i32
    scf.if %2 {
      %cst = arith.constant 0.000000e+00 : f32
      %44 = vector.broadcast %cst : f32 to vector<16x128xf32>
      %c0_19 = arith.constant 0 : index
      %c0_20 = arith.constant 0 : index
      %45 = vector.load %arg6[%c0_19, %c0_20] : memref<16x128xf32, #tpu.memory_space<vmem>>, vector<16x128xf32>
      tpu.vector_store %arg6[%c0_19, %c0_20], %44 {strides = array<i32>} : memref<16x128xf32, #tpu.memory_space<vmem>>, vector<16x128xf32>,
    } else {
    }
    %c0 = arith.constant 0 : index
    %c0_1 = arith.constant 0 : index
    %3 = vector.load %arg6[%c0, %c0_1] : memref<16x128xf32, #tpu.memory_space<vmem>>, vector<16x128xf32>
    %c512_i32 = arith.constant 512 : i32
    %4 = arith.muli %arg1, %c512_i32 : i32
    %c0_i32_2 = arith.constant 0 : i32
    %5 = arith.addi %4, %c0_i32_2 : i32
    %6 = tpu.assume_multiple %5, 128 : i32
    %c0_3 = arith.constant 0 : index
    %c0_4 = arith.constant 0 : index
    %7 = vector.load %arg2[%c0_3, %c0_4] : memref<16x512xf32, #tpu.memory_space<vmem>>, vector<16x128xf32>
    %c0_5 = arith.constant 0 : index
    %8 = arith.index_cast %6 : i32 to index
    %9 = vector.load %arg3[%c0_5, %8] : memref<1x512xf32, #tpu.memory_space<vmem>>, vector<1x128xf32>
    %10 = vector.broadcast %9 : vector<1x128xf32> to vector<16x128xf32>
    %11 = arith.mulf %7, %10 : vector<16x128xf32>
    %12 = arith.addf %3, %11 : vector<16x128xf32>
    %c512_i32_6 = arith.constant 512 : i32
    %13 = arith.muli %arg1, %c512_i32_6 : i32
    %c128_i32 = arith.constant 128 : i32
    %14 = arith.addi %13, %c128_i32 : i32
    %15 = tpu.assume_multiple %14, 128 : i32
    %c0_7 = arith.constant 0 : index
    %c128 = arith.constant 128 : index
    %16 = vector.load %arg2[%c0_7, %c128] : memref<16x512xf32, #tpu.memory_space<vmem>>, vector<16x128xf32>
    %c0_8 = arith.constant 0 : index
    %17 = arith.index_cast %15 : i32 to index
    %18 = vector.load %arg3[%c0_8, %17] : memref<1x512xf32, #tpu.memory_space<vmem>>, vector<1x128xf32>
    %19 = vector.broadcast %18 : vector<1x128xf32> to vector<16x128xf32>
    %20 = arith.mulf %16, %19 : vector<16x128xf32>
    %21 = arith.addf %12, %20 : vector<16x128xf32>
    %c512_i32_9 = arith.constant 512 : i32
    %22 = arith.muli %arg1, %c512_i32_9 : i32
    %c256_i32 = arith.constant 256 : i32
    %23 = arith.addi %22, %c256_i32 : i32
    %24 = tpu.assume_multiple %23, 128 : i32
    %c0_10 = arith.constant 0 : index
    %c256 = arith.constant 256 : index
    %25 = vector.load %arg2[%c0_10, %c256] : memref<16x512xf32, #tpu.memory_space<vmem>>, vector<16x128xf32>
    %c0_11 = arith.constant 0 : index
    %26 = arith.index_cast %24 : i32 to index
    %27 = vector.load %arg3[%c0_11, %26] : memref<1x512xf32, #tpu.memory_space<vmem>>, vector<1x128xf32>
    %28 = vector.broadcast %27 : vector<1x128xf32> to vector<16x128xf32>
    %29 = arith.mulf %25, %28 : vector<16x128xf32>
    %30 = arith.addf %21, %29 : vector<16x128xf32>
    %c512_i32_12 = arith.constant 512 : i32
    %31 = arith.muli %arg1, %c512_i32_12 : i32
    %c384_i32 = arith.constant 384 : i32
    %32 = arith.addi %31, %c384_i32 : i32
    %33 = tpu.assume_multiple %32, 128 : i32
    %c0_13 = arith.constant 0 : index
    %c384 = arith.constant 384 : index
    %34 = vector.load %arg2[%c0_13, %c384] : memref<16x512xf32, #tpu.memory_space<vmem>>, vector<16x128xf32>
    %c0_14 = arith.constant 0 : index
    %35 = arith.index_cast %33 : i32 to index
    %36 = vector.load %arg3[%c0_14, %35] : memref<1x512xf32, #tpu.memory_space<vmem>>, vector<1x128xf32>
    %37 = vector.broadcast %36 : vector<1x128xf32> to vector<16x128xf32>
    %38 = arith.mulf %34, %37 : vector<16x128xf32>
    %39 = arith.addf %30, %38 : vector<16x128xf32>
    %c0_15 = arith.constant 0 : index
    %c0_16 = arith.constant 0 : index
    %40 = vector.load %arg6[%c0_15, %c0_16] : memref<16x128xf32, #tpu.memory_space<vmem>>, vector<16x128xf32>
    tpu.vector_store %arg6[%c0_15, %c0_16], %39 {strides = array<i32>} : memref<16x128xf32, #tpu.memory_space<vmem>>, vector<16x128xf32>,
    %c0_i32_17 = arith.constant 0 : i32
    %41 = arith.cmpi eq, %arg1, %c0_i32_17 : i32
    %42 = arith.extui %41 : i1 to i32
    %c0_i32_18 = arith.constant 0 : i32
    %43 = arith.cmpi ne, %42, %c0_i32_18 : i32
    scf.if %43 {
      %c0_19 = arith.constant 0 : index
      %c0_20 = arith.constant 0 : index
      %44 = vector.load %arg6[%c0_19, %c0_20] : memref<16x128xf32, #tpu.memory_space<vmem>>, vector<16x128xf32>
      %cst = arith.constant dense<0.000000e+00> : vector<16xf32>
      %45 = vector.multi_reduction <add>, %44, %cst [1] : vector<16x128xf32> to vector<16xf32>
      %46 = vector.shape_cast %45 : vector<16xf32> to vector<16x1xf32>
      %c0_21 = arith.constant 0 : index
      %47 = memref.load %arg4[%c0_21] : memref<1xf32, #tpu.memory_space<smem>>
      %48 = vector.broadcast %47 : f32 to vector<16x1xf32>
      %49 = arith.addf %46, %48 : vector<16x1xf32>
      %cst_22 = arith.constant 0.000000e+00 : f32
      %50 = vector.broadcast %cst_22 : f32 to vector<16x1xf32>
      %51 = arith.subf %50, %49 : vector<16x1xf32>
      %52 = math.exp %51 : vector<16x1xf32>
      %cst_23 = arith.constant 1.000000e+00 : f32
      %53 = vector.broadcast %cst_23 : f32 to vector<16x1xf32>
      %54 = arith.addf %53, %52 : vector<16x1xf32>
      %cst_24 = arith.constant 1.000000e+00 : f32
      %55 = vector.broadcast %cst_24 : f32 to vector<16x1xf32>
      %56 = arith.divf %55, %54 : vector<16x1xf32>
      %c0_25 = arith.constant 0 : index
      %c0_26 = arith.constant 0 : index
      %57 = vector.load %arg5[%c0_25, %c0_26] : memref<16x1xf32, #tpu.memory_space<vmem>>, vector<16x1xf32>
      tpu.vector_store %arg5[%c0_25, %c0_26], %56 {strides = array<i32>} : memref<16x1xf32, #tpu.memory_space<vmem>>, vector<16x1xf32>,
    } else {
    }
    return
  }
  func.func @transform_0(%arg0: i32, %arg1: i32) -> (i32, i32) {
    %c0_i32 = arith.constant 0 : i32
    return %arg0, %arg1 : i32, i32
  }
  func.func @transform_1(%arg0: i32, %arg1: i32) -> (i32, i32) {
    %c0_i32 = arith.constant 0 : i32
    %c0_i32_0 = arith.constant 0 : i32
    %c0_i32_1 = arith.constant 0 : i32
    return %c0_i32, %c0_i32_0 : i32, i32
  }
  func.func @transform_2(%arg0: i32, %arg1: i32) -> i32 {
    %c0_i32 = arith.constant 0 : i32
    %c0_i32_0 = arith.constant 0 : i32
    return %c0_i32 : i32
  }
  func.func @transform_3(%arg0: i32, %arg1: i32) -> (i32, i32) {
    %c0_i32 = arith.constant 0 : i32
    %c0_i32_0 = arith.constant 0 : i32
    return %arg0, %c0_i32 : i32, i32
  }
}

</mosaic_0001>

<llo_original>
// kernel: tpu_custom_call.1
$region0: #{tpu_custom_call.1}
  #allocation0 [shape = 'u32[]', space=smem, size = 0x4, offset = 0x4, fixed_abs, tag = 'smem constant byte address 0x4 - core index']
  #allocation1 [shape = 'u32[144,128]{1,0:T(1,128)}', space=vmem, size = 0x12000, scoped, tag = 'internal scratch']
  #allocation2 [shape = 'f32[16,128]{1,0:T(8,128)}', space=vmem, size = 0x2000, scoped, tag = 'scratch operand']
  #allocation3 [shape = 'f32[1]{0:T(128)S(6)}', space=smem, size = 0x200, scoped, tag = 'scoped memory for tpu_custom_call.1']
  %s0 = inlined_call_operand.hbm [shape: f32[2,512], index: 0, kind: input, shape index: {}]
  %s1 = inlined_call_operand.vmem [shape: f32[1,512], index: 1, kind: input, shape index: {}]
  %s2 = inlined_call_operand.<no memory space> [shape: f32[1], index: 2, kind: input, shape index: {}]
  %s3 = inlined_call_operand.vmem [shape: f32[2,1], index: 3, kind: output, shape index: {}]
  %s4 = sld [smem:[#allocation0]]
  $region64: #{tpu_custom_call.1} parent=0
    _
  %s6 = ssub.s32 1, %s4
  %s7 = scalar_select 0, %s6, %s4
  %8 = sst [smem:[#allocation3]] %s2
  $region1: #{tpu_custom_call.1} parent=0
    #allocation4 [shape = 'u8[32768]{0}', space=vmem, size = 0x8000, scoped, tag = 'input window, operand 0, single buffered']
    #allocation5 [shape = 's32[1]{0}', space=sflag, size = 0x4, scoped, tag = 'scoped memory for tpu_custom_call.1']
    #allocation6 [shape = 'u8[8192]{0}', space=vmem, size = 0x2000, scoped, tag = 'output window, operand 0, single buffered']
    %9 = vsyncpa [#allocation5], 0
    // Predicated region
    $region2: #{tpu_custom_call.1} parent=1 // pred_check
      _
    $region3: #{tpu_custom_call.1} parent=1 // pred_check_branch
      %11 = sbr.rel (0) target = $region5
    $region4: #{tpu_custom_call.1} parent=1 // pred_region
      %s13 = ssub.s32 1024, 128
      %14 = vsyncadd [#allocation5], %s13
      %s15 = sshll.u32 [#allocation4], 4
      %s16 = int_to_ptr.vmem [resolvable:$true] %s15
      %21 = dma.hbm_to_vmem [thread:$0]  %s0, 128, %s16, [#allocation5], 128, 128, 8
    $region5: #{tpu_custom_call.1} parent=1 // pred_fallthru
      _
    // Predicated region
    $region6: #{tpu_custom_call.1} parent=1 // pred_check
      _
    $region7: #{tpu_custom_call.1} parent=1 // pred_check_branch
      %23 = sbr.rel (0) target = $region9
    $region8: #{tpu_custom_call.1} parent=1 // pred_region
      _
    $region9: #{tpu_custom_call.1} parent=1 // pred_fallthru
      _
    // Predicated region
    $region10: #{tpu_custom_call.1} parent=1 // pred_check
      _
    $region11: #{tpu_custom_call.1} parent=1 // pred_check_branch
      %25 = sbr.rel (0) target = $region13
    $region12: #{tpu_custom_call.1} parent=1 // pred_region
      _
    $region13: #{tpu_custom_call.1} parent=1 // pred_fallthru
      _
    // Predicated region
    $region14: #{tpu_custom_call.1} parent=1 // pred_check
      _
    $region15: #{tpu_custom_call.1} parent=1 // pred_check_branch
      %27 = sbr.rel (0) target = $region17
    $region16: #{tpu_custom_call.1} parent=1 // pred_region
      %28 = dma.done [#allocation5], 1024
    $region17: #{tpu_custom_call.1} parent=1 // pred_fallthru
      _
    %p29 = scmp.eq.s32.totalorder 0, 0
    // Predicated region
    $region18: #{tpu_custom_call.1} parent=1 // pred_check
      %p30 = pneg %p29
    $region19: #{tpu_custom_call.1} parent=1 // pred_check_branch
      %32 = sbr.rel (%p30) target = $region21
    $region20: #{tpu_custom_call.1} parent=1 // pred_region
      %33 = vst [vmem:[#allocation2] sm:$0xff] 0.0
      %34 = vst [vmem:[#allocation2 + $0x8] sm:$0xff] 0.0
    $region21: #{tpu_custom_call.1} parent=1 // pred_fallthru
      _
    %v35 = vld [vmem:[#allocation2] sm:$0xff]
    %v36 = vld [vmem:[#allocation2 + $0x8] sm:$0xff]
    %s37 = smul.u32 0, 512
    %v38 = vld [vmem:[#allocation4] sm:$0x3]
    %v39 = vld [vmem:[#allocation4 + $0x8] sm:$0x3]
    %v40 = vld [vmem:[#allocation4 + $0x10] sm:$0x3]
    %v41 = vld [vmem:[#allocation4 + $0x18] sm:$0x3]
    %v42 = vld [vmem:[#allocation4 + $0x20] sm:$0x3]
    %v43 = vld [vmem:[#allocation4 + $0x28] sm:$0x3]
    %v44 = vld [vmem:[#allocation4 + $0x30] sm:$0x3]
    %v45 = vld [vmem:[#allocation4 + $0x38] sm:$0x3]
    %s46 = sshra.s32 %s37, 7
    %s47 = sand.u32 %s37, 127
    %s48 = scalar_lea.vmem %s1, %s46
    %v49 = vld [vmem:[%s48] sm:$0x1]
    %v51 = vlaneseq
    %v52 = vshrl.u32 %v51, 7
    %v53 = vsub.s32 0, %v52
    %v54 = vrot.slane %v49, %v53
    %v55 = vcombine.high %v54, %v54
    %v57 = vunpack.c.l.s4 1983009808
    %v58 = vunpack.c.0.s8 %v57
    %v59 = vlaneseq
    %v60 = vshrl.u32 %v59, 7
    %v61 = vsub.s32 %v58, %v60
    %v62 = vrot.slane %v54, %v61
    %v64 = vunpack.c.l.s4 1983009808
    %v65 = vunpack.c.0.s8 %v64
    %v66 = vlaneseq
    %v67 = vshrl.u32 %v66, 7
    %v68 = vsub.s32 %v65, %v67
    %v69 = vrot.slane %v55, %v68
    %v70 = vcombine.high %v62, %v62
    %v71 = vcombine.high %v69, %v69
    %v76 = vmul.f32 %v38, %v62
    %v77 = vmul.f32 %v39, %v70
    %v78 = vmul.f32 %v40, %v69
    %v79 = vmul.f32 %v41, %v71
    %v80 = vmul.f32 %v42, %v62
    %v81 = vmul.f32 %v43, %v70
    %v82 = vmul.f32 %v44, %v69
    %v83 = vmul.f32 %v45, %v71
    %v92 = vcombine.low %v76, %v77
    %v93 = vcombine.low %v78, %v79
    %v95 = vunpack.c.l.s4 1983009808
    %v96 = vunpack.c.0.s8 %v95
    %v97 = vlaneseq
    %v98 = vshrl.u32 %v97, 7
    %v99 = vsub.s32 %v96, %v98
    %v100 = vrot.slane %v92, %v99
    %v102 = vunpack.c.l.s4 1983009808
    %v103 = vunpack.c.0.s8 %v102
    %v104 = vlaneseq
    %v105 = vshrl.u32 %v104, 7
    %v106 = vsub.s32 %v103, %v105
    %v107 = vrot.slane %v93, %v106
    %v108 = vcombine.low %v100, %v107
    %v109 = vcombine.low %v80, %v81
    %v110 = vcombine.low %v82, %v83
    %v112 = vunpack.c.l.s4 1983009808
    %v113 = vunpack.c.0.s8 %v112
    %v114 = vlaneseq
    %v115 = vshrl.u32 %v114, 7
    %v116 = vsub.s32 %v113, %v115
    %v117 = vrot.slane %v109, %v116
    %v119 = vunpack.c.l.s4 1983009808
    %v120 = vunpack.c.0.s8 %v119
    %v121 = vlaneseq
    %v122 = vshrl.u32 %v121, 7
    %v123 = vsub.s32 %v120, %v122
    %v124 = vrot.slane %v110, %v123
    %v125 = vcombine.low %v117, %v124
    %v128 = vadd.f32 %v35, %v108
    %v129 = vadd.f32 %v36, %v125
    %s130 = sadd.s32 %s37, 128
    %v131 = vld [vmem:[#allocation4 + $0x2] sm:$0x3]
    %v132 = vld [vmem:[#allocation4 + $0xa] sm:$0x3]
    %v133 = vld [vmem:[#allocation4 + $0x12] sm:$0x3]
    %v134 = vld [vmem:[#allocation4 + $0x1a] sm:$0x3]
    %v135 = vld [vmem:[#allocation4 + $0x22] sm:$0x3]
    %v136 = vld [vmem:[#allocation4 + $0x2a] sm:$0x3]
    %v137 = vld [vmem:[#allocation4 + $0x32] sm:$0x3]
    %v138 = vld [vmem:[#allocation4 + $0x3a] sm:$0x3]
    %s139 = sshra.s32 %s130, 7
    %s140 = sand.u32 %s130, 127
    %s141 = scalar_lea.vmem %s1, %s139
    %v142 = vld [vmem:[%s141] sm:$0x1]
    %v144 = vlaneseq
    %v145 = vshrl.u32 %v144, 7
    %v146 = vsub.s32 0, %v145
    %v147 = vrot.slane %v142, %v146
    %v148 = vcombine.high %v147, %v147
    %v150 = vunpack.c.l.s4 1983009808
    %v151 = vunpack.c.0.s8 %v150
    %v152 = vlaneseq
    %v153 = vshrl.u32 %v152, 7
    %v154 = vsub.s32 %v151, %v153
    %v155 = vrot.slane %v147, %v154
    %v157 = vunpack.c.l.s4 1983009808
    %v158 = vunpack.c.0.s8 %v157
    %v159 = vlaneseq
    %v160 = vshrl.u32 %v159, 7
    %v161 = vsub.s32 %v158, %v160
    %v162 = vrot.slane %v148, %v161
    %v163 = vcombine.high %v155, %v155
    %v164 = vcombine.high %v162, %v162
    %v169 = vmul.f32 %v131, %v155
    %v170 = vmul.f32 %v132, %v163
    %v171 = vmul.f32 %v133, %v162
    %v172 = vmul.f32 %v134, %v164
    %v173 = vmul.f32 %v135, %v155
    %v174 = vmul.f32 %v136, %v163
    %v175 = vmul.f32 %v137, %v162
    %v176 = vmul.f32 %v138, %v164
    %v185 = vcombine.low %v169, %v170
    %v186 = vcombine.low %v171, %v172
    %v188 = vunpack.c.l.s4 1983009808
    %v189 = vunpack.c.0.s8 %v188
    %v190 = vlaneseq
    %v191 = vshrl.u32 %v190, 7
    %v192 = vsub.s32 %v189, %v191
    %v193 = vrot.slane %v185, %v192
    %v195 = vunpack.c.l.s4 1983009808
    %v196 = vunpack.c.0.s8 %v195
    %v197 = vlaneseq
    %v198 = vshrl.u32 %v197, 7
    %v199 = vsub.s32 %v196, %v198
    %v200 = vrot.slane %v186, %v199
    %v201 = vcombine.low %v193, %v200
    %v202 = vcombine.low %v173, %v174
    %v203 = vcombine.low %v175, %v176
    %v205 = vunpack.c.l.s4 1983009808
    %v206 = vunpack.c.0.s8 %v205
    %v207 = vlaneseq
    %v208 = vshrl.u32 %v207, 7
    %v209 = vsub.s32 %v206, %v208
    %v210 = vrot.slane %v202, %v209
    %v212 = vunpack.c.l.s4 1983009808
    %v213 = vunpack.c.0.s8 %v212
    %v214 = vlaneseq
    %v215 = vshrl.u32 %v214, 7
    %v216 = vsub.s32 %v213, %v215
    %v217 = vrot.slane %v203, %v216
    %v218 = vcombine.low %v210, %v217
    %v221 = vadd.f32 %v128, %v201
    %v222 = vadd.f32 %v129, %v218
    %s223 = sadd.s32 %s37, 256
    %v224 = vld [vmem:[#allocation4 + $0x4] sm:$0x3]
    %v225 = vld [vmem:[#allocation4 + $0xc] sm:$0x3]
    %v226 = vld [vmem:[#allocation4 + $0x14] sm:$0x3]
    %v227 = vld [vmem:[#allocation4 + $0x1c] sm:$0x3]
    %v228 = vld [vmem:[#allocation4 + $0x24] sm:$0x3]
    %v229 = vld [vmem:[#allocation4 + $0x2c] sm:$0x3]
    %v230 = vld [vmem:[#allocation4 + $0x34] sm:$0x3]
    %v231 = vld [vmem:[#allocation4 + $0x3c] sm:$0x3]
    %s232 = sshra.s32 %s223, 7
    %s233 = sand.u32 %s223, 127
    %s234 = scalar_lea.vmem %s1, %s232
    %v235 = vld [vmem:[%s234] sm:$0x1]
    %v237 = vlaneseq
    %v238 = vshrl.u32 %v237, 7
    %v239 = vsub.s32 0, %v238
    %v240 = vrot.slane %v235, %v239
    %v241 = vcombine.high %v240, %v240
    %v243 = vunpack.c.l.s4 1983009808
    %v244 = vunpack.c.0.s8 %v243
    %v245 = vlaneseq
    %v246 = vshrl.u32 %v245, 7
    %v247 = vsub.s32 %v244, %v246
    %v248 = vrot.slane %v240, %v247
    %v250 = vunpack.c.l.s4 1983009808
    %v251 = vunpack.c.0.s8 %v250
    %v252 = vlaneseq
    %v253 = vshrl.u32 %v252, 7
    %v254 = vsub.s32 %v251, %v253
    %v255 = vrot.slane %v241, %v254
    %v256 = vcombine.high %v248, %v248
    %v257 = vcombine.high %v255, %v255
    %v262 = vmul.f32 %v224, %v248
    %v263 = vmul.f32 %v225, %v256
    %v264 = vmul.f32 %v226, %v255
    %v265 = vmul.f32 %v227, %v257
    %v266 = vmul.f32 %v228, %v248
    %v267 = vmul.f32 %v229, %v256
    %v268 = vmul.f32 %v230, %v255
    %v269 = vmul.f32 %v231, %v257
    %v278 = vcombine.low %v262, %v263
    %v279 = vcombine.low %v264, %v265
    %v281 = vunpack.c.l.s4 1983009808
    %v282 = vunpack.c.0.s8 %v281
    %v283 = vlaneseq
    %v284 = vshrl.u32 %v283, 7
    %v285 = vsub.s32 %v282, %v284
    %v286 = vrot.slane %v278, %v285
    %v288 = vunpack.c.l.s4 1983009808
    %v289 = vunpack.c.0.s8 %v288
    %v290 = vlaneseq
    %v291 = vshrl.u32 %v290, 7
    %v292 = vsub.s32 %v289, %v291
    %v293 = vrot.slane %v279, %v292
    %v294 = vcombine.low %v286, %v293
    %v295 = vcombine.low %v266, %v267
    %v296 = vcombine.low %v268, %v269
    %v298 = vunpack.c.l.s4 1983009808
    %v299 = vunpack.c.0.s8 %v298
    %v300 = vlaneseq
    %v301 = vshrl.u32 %v300, 7
    %v302 = vsub.s32 %v299, %v301
    %v303 = vrot.slane %v295, %v302
    %v305 = vunpack.c.l.s4 1983009808
    %v306 = vunpack.c.0.s8 %v305
    %v307 = vlaneseq
    %v308 = vshrl.u32 %v307, 7
    %v309 = vsub.s32 %v306, %v308
    %v310 = vrot.slane %v296, %v309
    %v311 = vcombine.low %v303, %v310
    %v314 = vadd.f32 %v221, %v294
    %v315 = vadd.f32 %v222, %v311
    %s316 = sadd.s32 %s37, 384
    %v317 = vld [vmem:[#allocation4 + $0x6] sm:$0x3]
    %v318 = vld [vmem:[#allocation4 + $0xe] sm:$0x3]
    %v319 = vld [vmem:[#allocation4 + $0x16] sm:$0x3]
    %v320 = vld [vmem:[#allocation4 + $0x1e] sm:$0x3]
    %v321 = vld [vmem:[#allocation4 + $0x26] sm:$0x3]
    %v322 = vld [vmem:[#allocation4 + $0x2e] sm:$0x3]
    %v323 = vld [vmem:[#allocation4 + $0x36] sm:$0x3]
    %v324 = vld [vmem:[#allocation4 + $0x3e] sm:$0x3]
    %s325 = sshra.s32 %s316, 7
    %s326 = sand.u32 %s316, 127
    %s327 = scalar_lea.vmem %s1, %s325
    %v328 = vld [vmem:[%s327] sm:$0x1]
    %v330 = vlaneseq
    %v331 = vshrl.u32 %v330, 7
    %v332 = vsub.s32 0, %v331
    %v333 = vrot.slane %v328, %v332
    %v334 = vcombine.high %v333, %v333
    %v336 = vunpack.c.l.s4 1983009808
    %v337 = vunpack.c.0.s8 %v336
    %v338 = vlaneseq
    %v339 = vshrl.u32 %v338, 7
    %v340 = vsub.s32 %v337, %v339
    %v341 = vrot.slane %v333, %v340
    %v343 = vunpack.c.l.s4 1983009808
    %v344 = vunpack.c.0.s8 %v343
    %v345 = vlaneseq
    %v346 = vshrl.u32 %v345, 7
    %v347 = vsub.s32 %v344, %v346
    %v348 = vrot.slane %v334, %v347
    %v349 = vcombine.high %v341, %v341
    %v350 = vcombine.high %v348, %v348
    %v355 = vmul.f32 %v317, %v341
    %v356 = vmul.f32 %v318, %v349
    %v357 = vmul.f32 %v319, %v348
    %v358 = vmul.f32 %v320, %v350
    %v359 = vmul.f32 %v321, %v341
    %v360 = vmul.f32 %v322, %v349
    %v361 = vmul.f32 %v323, %v348
    %v362 = vmul.f32 %v324, %v350
    %v371 = vcombine.low %v355, %v356
    %v372 = vcombine.low %v357, %v358
    %v374 = vunpack.c.l.s4 1983009808
    %v375 = vunpack.c.0.s8 %v374
    %v376 = vlaneseq
    %v377 = vshrl.u32 %v376, 7
    %v378 = vsub.s32 %v375, %v377
    %v379 = vrot.slane %v371, %v378
    %v381 = vunpack.c.l.s4 1983009808
    %v382 = vunpack.c.0.s8 %v381
    %v383 = vlaneseq
    %v384 = vshrl.u32 %v383, 7
    %v385 = vsub.s32 %v382, %v384
    %v386 = vrot.slane %v372, %v385
    %v387 = vcombine.low %v379, %v386
    %v388 = vcombine.low %v359, %v360
    %v389 = vcombine.low %v361, %v362
    %v391 = vunpack.c.l.s4 1983009808
    %v392 = vunpack.c.0.s8 %v391
    %v393 = vlaneseq
    %v394 = vshrl.u32 %v393, 7
    %v395 = vsub.s32 %v392, %v394
    %v396 = vrot.slane %v388, %v395
    %v398 = vunpack.c.l.s4 1983009808
    %v399 = vunpack.c.0.s8 %v398
    %v400 = vlaneseq
    %v401 = vshrl.u32 %v400, 7
    %v402 = vsub.s32 %v399, %v401
    %v403 = vrot.slane %v389, %v402
    %v404 = vcombine.low %v396, %v403
    %v407 = vadd.f32 %v314, %v387
    %v408 = vadd.f32 %v315, %v404
    %409 = vst [vmem:[#allocation2] sm:$0xff] %v407
    %410 = vst [vmem:[#allocation2 + $0x8] sm:$0xff] %v408
    // Predicated region
    $region22: #{tpu_custom_call.1} parent=1 // pred_check
      %p411 = pneg %p29
    $region23: #{tpu_custom_call.1} parent=1 // pred_check_branch
      %413 = sbr.rel (%p411) target = $region25
    $region24: #{tpu_custom_call.1} parent=1 // pred_region
      %v414 = vld [vmem:[#allocation2] sm:$0xff]
      %v415 = vld [vmem:[#allocation2 + $0x8] sm:$0xff]
      %416 = vadd.xlane.f32.xlu0 %v414
      %v417 = vpop.xlane.xlu0 %416
      %418 = vadd.xlane.f32.xlu0 %v415
      %v419 = vpop.xlane.xlu0 %418
      %s420 = sld [smem:[#allocation3]]
      %v421 = vstv %s420
      %v422 = vadd.f32 %v417, %v421
      %v423 = vadd.f32 %v419, %v421
      %v424 = vsub.f32 0.0, %v422
      %v425 = vsub.f32 0.0, %v423
      %v426 = vmul.f32 %v424, 1.442695
      %v427 = vpow.pop %v426
      %v428 = vmul.f32 %v425, 1.442695
      %v429 = vpow.pop %v428
      %v430 = vadd.f32 %v427, 1.0
      %v431 = vadd.f32 %v429, 1.0
      %v432 = vrcp.pop %v430
      %v433 = vmul.f32 1.0, %v432
      %v434 = vrcp.pop %v431
      %v435 = vmul.f32 1.0, %v434
      %vm436 = vcmask 7168
      %437 = vst.msk [vmem:[#allocation6] sm:$0xff] %vm436, %v433
      %438 = vst.msk [vmem:[#allocation6 + $0x8] sm:$0xff] %vm436, %v435
    $region25: #{tpu_custom_call.1} parent=1 // pred_fallthru
      _
    // Predicated region
    $region26: #{tpu_custom_call.1} parent=1 // pred_check
      _
    $region27: #{tpu_custom_call.1} parent=1 // pred_check_branch
      %440 = sbr.rel (0) target = $region29
    $region28: #{tpu_custom_call.1} parent=1 // pred_region
      // Predicated region
      $region30: #{tpu_custom_call.1} parent=28 // pred_check
        _
      $region31: #{tpu_custom_call.1} parent=28 // pred_check_branch
        %442 = sbr.rel (0) target = $region33
      $region32: #{tpu_custom_call.1} parent=28 // pred_region
        // Predicated region
        $region34: #{tpu_custom_call.1} parent=32 // pred_check
          _
        $region35: #{tpu_custom_call.1} parent=32 // pred_check_branch
          %444 = sbr.rel target = $region37
        $region36: #{tpu_custom_call.1} parent=32 // pred_region
          // Predicated region
          $region49: #{tpu_custom_call.1} parent=36 // pred_check
            _
          $region50: #{tpu_custom_call.1} parent=36 // pred_check_branch
            %459 = sbr.rel (0) target = $region52
          $region51: #{tpu_custom_call.1} parent=36 // pred_region
            loop: start=0, step=1, limit=1
            $region53: #{tpu_custom_call.1} parent=51 // loop_pre_header
              _
            $region54: #{tpu_custom_call.1} parent=51 // loop_header
              %s462 = sphi 0, %s466
              %p463 = scmp.ge.s32.totalorder %s462, 1
              %s467 = sphi [#allocation6], [#allocation6]
              %s468 = sphi %s3, %s3
            $region55: #{tpu_custom_call.1} parent=51 // loop_header_branch
              %465 = sbr.rel (%p463) target = $region59
            $region56: #{tpu_custom_call.1} parent=51 // loop_body
              %v469 = vld [vmem:[%s467] sm:$0x3]
              %470 = vst [vmem:[%s468] sm:$0x3] %v469
            $region57: #{tpu_custom_call.1} parent=51 // loop_footer
              %s466 = sadd.s32 1, %s462
            $region58: #{tpu_custom_call.1} parent=51 // loop_footer_branch
              %461 = sbr.rel target = $region54
            $region59: #{tpu_custom_call.1} parent=51 // loop_exit
              _
          $region52: #{tpu_custom_call.1} parent=36 // pred_fallthru
            _
        $region37: #{tpu_custom_call.1} parent=32 // pred_fallthru
          _
        // Predicated region
        $region38: #{tpu_custom_call.1} parent=32 // pred_check
          _
        $region39: #{tpu_custom_call.1} parent=32 // pred_check_branch
          %446 = sbr.rel (0) target = $region41
        $region40: #{tpu_custom_call.1} parent=32 // pred_region
          loop: start=0, step=1, limit=1
          $region42: #{tpu_custom_call.1} parent=40 // loop_pre_header
            _
          $region43: #{tpu_custom_call.1} parent=40 // loop_header
            %s449 = sphi 0, %s453
            %p450 = scmp.ge.s32.totalorder %s449, 1
            %s454 = sphi [#allocation6], [#allocation6]
            %s455 = sphi %s3, %s3
          $region44: #{tpu_custom_call.1} parent=40 // loop_header_branch
            %452 = sbr.rel (%p450) target = $region48
          $region45: #{tpu_custom_call.1} parent=40 // loop_body
            %v456 = vld [vmem:[%s454] sm:$0x3]
            %457 = vst [vmem:[%s455] sm:$0x3] %v456
          $region46: #{tpu_custom_call.1} parent=40 // loop_footer
            %s453 = sadd.s32 1, %s449
          $region47: #{tpu_custom_call.1} parent=40 // loop_footer_branch
            %448 = sbr.rel target = $region43
          $region48: #{tpu_custom_call.1} parent=40 // loop_exit
            _
        $region41: #{tpu_custom_call.1} parent=32 // pred_fallthru
          _
      $region33: #{tpu_custom_call.1} parent=28 // pred_fallthru
        _
      %471 = vnop
    $region29: #{tpu_custom_call.1} parent=1 // pred_fallthru
      _
    // Predicated region
    $region60: #{tpu_custom_call.1} parent=1 // pred_check
      _
    $region61: #{tpu_custom_call.1} parent=1 // pred_check_branch
      %473 = sbr.rel (0) target = $region63
    $region62: #{tpu_custom_call.1} parent=1 // pred_region
      _
    $region63: #{tpu_custom_call.1} parent=1 // pred_fallthru
      _
    %474 = vsyncpa [#allocation5], 1

</llo_original>
